<compile_context>
chip_gen: v5e
topology: v5e:2x2
jax: 0.10.0
libtpu: 0.0.40
codegen_flags: <defaults>
</compile_context>

<pallas_src>
import functools

import jax
import jax.numpy as jnp
from jax import lax
from jax.experimental import pallas as pl
from jax.experimental.pallas import tpu as pltpu  # noqa: F401  (TPU backend)


# ---------------------------------------------------------------------------
# Fused kernel (single invocation, everything 2D, state and activations in
# vregs).  Ref order:
#   [x_flat, h0_flat, c0_flat, ctx_flat, (wih, whh, bias)*nlayer,
#    wpq, wpa, wr, br,                    # inputs
#    dec, state]                          # outputs
# ---------------------------------------------------------------------------
def _fused_kernel(nlayer, T, B, H, *refs):
    x_ref, h0_ref, c0_ref, ctx_ref = refs[:4]
    layer_refs = [refs[4 + 3 * l: 7 + 3 * l] for l in range(nlayer)]
    pos = 4 + 3 * nlayer
    wpq_ref, wpa_ref, wr_ref, br_ref = refs[pos:pos + 4]
    dec_ref, state_ref = refs[pos + 4:pos + 6]

    x = x_ref[...]                              # (T*B, E), time-major rows t*B+b

    for l in range(nlayer):
        wih_ref, whh_ref, b_ref = layer_refs[l]
        # Hoisted input projection: all timesteps & batch rows in one matmul.
        # (bias folded; cell-gate columns already pre-scaled by 2 in wrapper)
        gx = jnp.dot(x, wih_ref[...],
                     preferred_element_type=jnp.float32) + b_ref[...]   # (T*B, 4H)
        whh = whh_ref[...]                                               # (H, 4H)

        h = h0_ref[l * B:(l + 1) * B, :]                                 # (B, H)
        c = c0_ref[l * B:(l + 1) * B, :]
        hs = []
        # T is small & static -> fully unrolled, visible to the LLO scheduler.
        for t in range(T):
            gates = gx[t * B:(t + 1) * B, :] + jnp.dot(
                h, whh, preferred_element_type=jnp.float32)              # (B, 4H)
            s = jax.nn.sigmoid(gates)          # one full-row EUP pass
            i = s[:, 0 * H:1 * H]
            f = s[:, 1 * H:2 * H]
            g = 2.0 * s[:, 2 * H:3 * H] - 1.0  # tanh(a) = 2*sigmoid(2a) - 1
            o = s[:, 3 * H:4 * H]
            c = f * c + i * g
            h = o * jnp.tanh(c)
            hs.append(h)

        state_ref[l * B:(l + 1) * B, :] = h                      # final h, layer l
        state_ref[(nlayer + l) * B:(nlayer + l + 1) * B, :] = c  # final c, layer l

        # inter-layer dropout (droph) is identity in eval mode.
        x = jnp.concatenate(hs, axis=0)        # (T*B, H) time-major rnn_out

    # ---- dot-product attention, batched via a block-diagonal mask ----------
    q = x                                      # (T*B, H), rows t*B+b
    ctx = ctx_ref[...]                         # (S*B, H), rows s*B+b
    scores = lax.dot_general(q, ctx, (((1,), (1,)), ((), ())),
                             preferred_element_type=jnp.float32)     # (T*B, S*B)
    row_b = lax.broadcasted_iota(jnp.int32, scores.shape, 0) % B
    col_b = lax.broadcasted_iota(jnp.int32, scores.shape, 1) % B
    scores = jnp.where(row_b == col_b, scores, -1e30)  # mask cross-batch pairs
    m = jnp.max(scores, axis=-1, keepdims=True)
    e = jnp.exp(scores - m)
    p = e / jnp.sum(e, axis=-1, keepdims=True)        # exact softmax over src
    ant = jnp.dot(p, ctx, preferred_element_type=jnp.float32)        # (T*B, H)

    # ---- concat_proj (tanh, bias=False for dotprod) without the concat -----
    att = jnp.tanh(
        jnp.dot(q, wpq_ref[...], preferred_element_type=jnp.float32)
        + jnp.dot(ant, wpa_ref[...], preferred_element_type=jnp.float32))  # (T*B, A)

    # ---- regressor ----------------------------------------------------------
    dec = jnp.dot(att, wr_ref[...],
                  preferred_element_type=jnp.float32) + br_ref[...]  # (T*B, O)
    dec_ref[...] = dec.astype(dec_ref.dtype)


# ---------------------------------------------------------------------------
# Wrapper: layout plumbing (contiguous reshapes only) + one pallas_call.
# ---------------------------------------------------------------------------
def seq_regressor_forward(params, tgt, hid, context):
    """tgt: (T, B) int32; hid = (h0, c0) each (nlayer, B, H); context: (S, B, H).
    Returns (dec_out (T, B, nout), (hT, cT) each (nlayer, B, H))."""
    h0, c0 = hid
    nlayer, B, H = h0.shape
    T = tgt.shape[0]
    S = context.shape[0]
    A = params["w_proj"].shape[0]
    O = params["w_reg"].shape[0]

    # Embedding gather straight into the kernel's time-major flat layout
    # (row index t*B + b); dropouts are identity in eval mode.
    x_flat = params["embedding"][tgt.reshape(-1)]          # (T*B, E)
    h0_flat = h0.reshape(nlayer * B, H)                     # contiguous (free)
    c0_flat = c0.reshape(nlayer * B, H)
    ctx_flat = context.reshape(S * B, H)                    # rows s*B + b

    layer_args = []
    for lp in params["lstm"]:
        wih_t = jnp.transpose(lp["w_ih"])                   # (E_l, 4H)
        whh_t = jnp.transpose(lp["w_hh"])                   # (H, 4H)
        bias = (lp["b_ih"] + lp["b_hh"]).reshape(1, 4 * H)
        # Pre-scale the cell-gate (g) columns by 2 so the kernel recovers
        # tanh with a single full-row sigmoid: tanh(a) = 2*sigmoid(2a) - 1.
        wih_t = wih_t.at[:, 2 * H:3 * H].multiply(2.0)
        whh_t = whh_t.at[:, 2 * H:3 * H].multiply(2.0)
        bias = bias.at[:, 2 * H:3 * H].multiply(2.0)
        layer_args += [wih_t, whh_t, bias]

    wp_t = jnp.transpose(params["w_proj"])                  # (2H, A)
    wpq = wp_t[:H]                                          # acts on rnn_out
    wpa = wp_t[H:]                                          # acts on attention vec
    wr_t = jnp.transpose(params["w_reg"])                   # (A, O)
    br = params["b_reg"].reshape(1, O)

    kernel = functools.partial(_fused_kernel, nlayer, T, B, H)

    dec_flat, state = pl.pallas_call(
        kernel,
        out_shape=(
            jax.ShapeDtypeStruct((T * B, O), jnp.float32),
            jax.ShapeDtypeStruct((2 * nlayer * B, H), jnp.float32),
        ),
    )(x_flat, h0_flat, c0_flat, ctx_flat, *layer_args, wpq, wpa, wr_t, br)

    dec_out = dec_flat.reshape(T, B, O)                     # contiguous reshape
    hT = state[:nlayer * B].reshape(nlayer, B, H)
    cT = state[nlayer * B:].reshape(nlayer, B, H)
    return dec_out, (hT, cT)


# ---------------------------------------------------------------------------
# Pure-JAX reference (for correctness check only).
# ---------------------------------------------------------------------------
def reference_forward(params, tgt, hid, context):
    h0, c0 = hid
    x = params["embedding"][tgt]

    def cell(lp, carry, xt):
        h, c = carry
        H = h.shape[-1]
        gates = xt @ lp["w_ih"].T + h @ lp["w_hh"].T + lp["b_ih"] + lp["b_hh"]
        i = jax.nn.sigmoid(gates[:, :H])
        f = jax.nn.sigmoid(gates[:, H:2 * H])
        g = jnp.tanh(gates[:, 2 * H:3 * H])
        o = jax.nn.sigmoid(gates[:, 3 * H:])
        c = f * c + i * g
        h = o * jnp.tanh(c)
        return (h, c), h

    h_fs, c_fs = [], []
    for l, lp in enumerate(params["lstm"]):
        (hT, cT), x = lax.scan(functools.partial(cell, lp), (h0[l], c0[l]), x)
        h_fs.append(hT)
        c_fs.append(cT)
    rnn_out = x                                            # (T, B, H)

    score = jnp.einsum("sbh,tbh->stb", context, rnn_out)   # (S, T, B)
    prob = jax.nn.softmax(score, axis=0)
    ant = jnp.einsum("stb,sbh->tbh", prob, context)        # (T, B, H)
    cat = jnp.concatenate([rnn_out, ant], axis=-1)         # (T, B, 2H)
    att = jnp.tanh(cat @ params["w_proj"].T)
    dec = att @ params["w_reg"].T + params["b_reg"]
    return dec, (jnp.stack(h_fs, 0), jnp.stack(c_fs, 0))


# ---------------------------------------------------------------------------
if __name__ == "__main__":
    ntoken, nemb, nhid, natthid, nout = 50, 32, 32, 32, 8
    nlayer, pad_idx = 1, 0
    T, B, S = 8, 2, 8

    key = jax.random.PRNGKey(0)
    ks = jax.random.split(key, 16)

    emb = 0.1 * jax.random.normal(ks[0], (ntoken, nemb), jnp.float32)
    emb = emb.at[pad_idx].set(0.0)  # padding_idx row zeroed at init

    lstm_params = []
    for l in range(nlayer):
        in_sz = nemb if l == 0 else nhid
        lstm_params.append(dict(
            w_ih=0.1 * jax.random.normal(ks[1 + 4 * l], (4 * nhid, in_sz), jnp.float32),
            w_hh=0.1 * jax.random.normal(ks[2 + 4 * l], (4 * nhid, nhid), jnp.float32),
            b_ih=0.1 * jax.random.normal(ks[3 + 4 * l], (4 * nhid,), jnp.float32),
            b_hh=0.1 * jax.random.normal(ks[4 + 4 * l], (4 * nhid,), jnp.float32),
        ))

    params = dict(
        embedding=emb,
        lstm=lstm_params,
        w_proj=0.1 * jax.random.normal(ks[10], (natthid, 2 * nhid), jnp.float32),
        w_reg=0.1 * jax.random.normal(ks[11], (nout, natthid), jnp.float32),
        b_reg=0.1 * jax.random.normal(ks[12], (nout,), jnp.float32),
    )

    tgt = jax.random.randint(ks[13], (T, B), 1, ntoken, jnp.int32)
    h0 = 0.1 * jax.random.normal(ks[14], (nlayer, B, nhid), jnp.float32)
    c0 = 0.1 * jax.random.normal(ks[15], (nlayer, B, nhid), jnp.float32)
    context = 0.1 * jax.random.normal(ks[5], (S, B, nhid), jnp.float32)

    fwd = jax.jit(seq_regressor_forward)
    dec_out, (hT, cT) = fwd(params, tgt, (h0, c0), context)
    dec_out = jax.block_until_ready(dec_out)
    hT = jax.block_until_ready(hT)
    cT = jax.block_until_ready(cT)

    # correctness check against pure-JAX reference
    # (tolerance 1e-3: MXU f32 passes + tanh-via-sigmoid identity in the gates)
    dec_ref, (hT_ref, cT_ref) = reference_forward(params, tgt, (h0, c0), context)
    assert dec_out.shape == (T, B, nout)
    assert hT.shape == (nlayer, B, nhid) and cT.shape == (nlayer, B, nhid)
    assert jnp.allclose(dec_out, dec_ref, atol=1e-3, rtol=1e-3)
    assert jnp.allclose(hT, hT_ref, atol=1e-3, rtol=1e-3)
    assert jnp.allclose(cT, cT_ref, atol=1e-3, rtol=1e-3)

    print("KERNEL_OK")
</pallas_src>

<mosaic_0001>
module attributes {stable_mosaic.version = 11 : i64} {
  func.func @_fused_kernel(%arg0: memref<16x32xf32, #tpu.memory_space<vmem>>, %arg1: memref<2x32xf32, #tpu.memory_space<vmem>>, %arg2: memref<2x32xf32, #tpu.memory_space<vmem>>, %arg3: memref<16x32xf32, #tpu.memory_space<vmem>>, %arg4: memref<32x128xf32, #tpu.memory_space<vmem>>, %arg5: memref<32x128xf32, #tpu.memory_space<vmem>>, %arg6: memref<1x128xf32, #tpu.memory_space<vmem>>, %arg7: memref<32x32xf32, #tpu.memory_space<vmem>>, %arg8: memref<32x32xf32, #tpu.memory_space<vmem>>, %arg9: memref<32x8xf32, #tpu.memory_space<vmem>>, %arg10: memref<1x8xf32, #tpu.memory_space<vmem>>, %arg11: memref<16x8xf32, #tpu.memory_space<vmem>>, %arg12: memref<4x32xf32, #tpu.memory_space<vmem>>) attributes {dimension_semantics = [], scalar_prefetch = 0 : i64, scratch_operands = 0 : i64, tpu.core_type = #tpu.core_type<tc>} {
    %c0 = arith.constant 0 : index
    %c0_0 = arith.constant 0 : index
    %0 = vector.load %arg0[%c0, %c0_0] : memref<16x32xf32, #tpu.memory_space<vmem>>, vector<16x32xf32>
    %c0_1 = arith.constant 0 : index
    %c0_2 = arith.constant 0 : index
    %1 = vector.load %arg4[%c0_1, %c0_2] : memref<32x128xf32, #tpu.memory_space<vmem>>, vector<32x128xf32>
    %cst = arith.constant dense<0.000000e+00> : vector<16x128xf32>
    %2 = tpu.matmul %0, %1, %cst {dimension_numbers = #tpu.dot_dimension_numbers<[1], [0], [0], [1], [0, 0, 1, 1], [], []>} : vector<16x32xf32>, vector<32x128xf32>, vector<16x128xf32> -> vector<16x128xf32>
    %c0_3 = arith.constant 0 : index
    %c0_4 = arith.constant 0 : index
    %3 = vector.load %arg6[%c0_3, %c0_4] : memref<1x128xf32, #tpu.memory_space<vmem>>, vector<1x128xf32>
    %4 = vector.broadcast %3 : vector<1x128xf32> to vector<16x128xf32>
    %5 = arith.addf %2, %4 : vector<16x128xf32>
    %c0_5 = arith.constant 0 : index
    %c0_6 = arith.constant 0 : index
    %6 = vector.load %arg5[%c0_5, %c0_6] : memref<32x128xf32, #tpu.memory_space<vmem>>, vector<32x128xf32>
    %c0_7 = arith.constant 0 : index
    %c0_8 = arith.constant 0 : index
    %7 = vector.load %arg1[%c0_7, %c0_8] : memref<2x32xf32, #tpu.memory_space<vmem>>, vector<2x32xf32>
    %c0_9 = arith.constant 0 : index
    %c0_10 = arith.constant 0 : index
    %8 = vector.load %arg2[%c0_9, %c0_10] : memref<2x32xf32, #tpu.memory_space<vmem>>, vector<2x32xf32>
    %9 = vector.extract_strided_slice %5 {offsets = [0, 0], sizes = [2, 128], strides = [1, 1]} : vector<16x128xf32> to vector<2x128xf32>
    %cst_11 = arith.constant dense<0.000000e+00> : vector<2x128xf32>
    %10 = tpu.matmul %7, %6, %cst_11 {dimension_numbers = #tpu.dot_dimension_numbers<[1], [0], [0], [1], [0, 0, 1, 1], [], []>} : vector<2x32xf32>, vector<32x128xf32>, vector<2x128xf32> -> vector<2x128xf32>
    %11 = arith.addf %9, %10 : vector<2x128xf32>
    %12 = arith.negf %11 : vector<2x128xf32>
    %13 = math.exp %12 : vector<2x128xf32>
    %cst_12 = arith.constant 1.000000e+00 : f32
    %14 = vector.broadcast %cst_12 : f32 to vector<2x128xf32>
    %15 = arith.addf %14, %13 : vector<2x128xf32>
    %16 = arith.divf %14, %15 : vector<2x128xf32>
    %17 = vector.extract_strided_slice %16 {offsets = [0, 0], sizes = [2, 32], strides = [1, 1]} : vector<2x128xf32> to vector<2x32xf32>
    %18 = vector.extract_strided_slice %16 {offsets = [0, 32], sizes = [2, 32], strides = [1, 1]} : vector<2x128xf32> to vector<2x32xf32>
    %19 = vector.extract_strided_slice %16 {offsets = [0, 64], sizes = [2, 32], strides = [1, 1]} : vector<2x128xf32> to vector<2x32xf32>
    %cst_13 = arith.constant 2.000000e+00 : f32
    %20 = vector.broadcast %cst_13 : f32 to vector<2x32xf32>
    %21 = arith.mulf %20, %19 : vector<2x32xf32>
    %cst_14 = arith.constant 1.000000e+00 : f32
    %22 = vector.broadcast %cst_14 : f32 to vector<2x32xf32>
    %23 = arith.subf %21, %22 : vector<2x32xf32>
    %24 = vector.extract_strided_slice %16 {offsets = [0, 96], sizes = [2, 32], strides = [1, 1]} : vector<2x128xf32> to vector<2x32xf32>
    %25 = arith.mulf %18, %8 : vector<2x32xf32>
    %26 = arith.mulf %17, %23 : vector<2x32xf32>
    %27 = arith.addf %25, %26 : vector<2x32xf32>
    %28 = math.tanh %27 : vector<2x32xf32>
    %29 = arith.mulf %24, %28 : vector<2x32xf32>
    %30 = vector.extract_strided_slice %5 {offsets = [2, 0], sizes = [2, 128], strides = [1, 1]} : vector<16x128xf32> to vector<2x128xf32>
    %cst_15 = arith.constant dense<0.000000e+00> : vector<2x128xf32>
    %31 = tpu.matmul %29, %6, %cst_15 {dimension_numbers = #tpu.dot_dimension_numbers<[1], [0], [0], [1], [0, 0, 1, 1], [], []>} : vector<2x32xf32>, vector<32x128xf32>, vector<2x128xf32> -> vector<2x128xf32>
    %32 = arith.addf %30, %31 : vector<2x128xf32>
    %33 = arith.negf %32 : vector<2x128xf32>
    %34 = math.exp %33 : vector<2x128xf32>
    %cst_16 = arith.constant 1.000000e+00 : f32
    %35 = vector.broadcast %cst_16 : f32 to vector<2x128xf32>
    %36 = arith.addf %35, %34 : vector<2x128xf32>
    %37 = arith.divf %35, %36 : vector<2x128xf32>
    %38 = vector.extract_strided_slice %37 {offsets = [0, 0], sizes = [2, 32], strides = [1, 1]} : vector<2x128xf32> to vector<2x32xf32>
    %39 = vector.extract_strided_slice %37 {offsets = [0, 32], sizes = [2, 32], strides = [1, 1]} : vector<2x128xf32> to vector<2x32xf32>
    %40 = vector.extract_strided_slice %37 {offsets = [0, 64], sizes = [2, 32], strides = [1, 1]} : vector<2x128xf32> to vector<2x32xf32>
    %cst_17 = arith.constant 2.000000e+00 : f32
    %41 = vector.broadcast %cst_17 : f32 to vector<2x32xf32>
    %42 = arith.mulf %41, %40 : vector<2x32xf32>
    %cst_18 = arith.constant 1.000000e+00 : f32
    %43 = vector.broadcast %cst_18 : f32 to vector<2x32xf32>
    %44 = arith.subf %42, %43 : vector<2x32xf32>
    %45 = vector.extract_strided_slice %37 {offsets = [0, 96], sizes = [2, 32], strides = [1, 1]} : vector<2x128xf32> to vector<2x32xf32>
    %46 = arith.mulf %39, %27 : vector<2x32xf32>
    %47 = arith.mulf %38, %44 : vector<2x32xf32>
    %48 = arith.addf %46, %47 : vector<2x32xf32>
    %49 = math.tanh %48 : vector<2x32xf32>
    %50 = arith.mulf %45, %49 : vector<2x32xf32>
    %51 = vector.extract_strided_slice %5 {offsets = [4, 0], sizes = [2, 128], strides = [1, 1]} : vector<16x128xf32> to vector<2x128xf32>
    %cst_19 = arith.constant dense<0.000000e+00> : vector<2x128xf32>
    %52 = tpu.matmul %50, %6, %cst_19 {dimension_numbers = #tpu.dot_dimension_numbers<[1], [0], [0], [1], [0, 0, 1, 1], [], []>} : vector<2x32xf32>, vector<32x128xf32>, vector<2x128xf32> -> vector<2x128xf32>
    %53 = arith.addf %51, %52 : vector<2x128xf32>
    %54 = arith.negf %53 : vector<2x128xf32>
    %55 = math.exp %54 : vector<2x128xf32>
    %cst_20 = arith.constant 1.000000e+00 : f32
    %56 = vector.broadcast %cst_20 : f32 to vector<2x128xf32>
    %57 = arith.addf %56, %55 : vector<2x128xf32>
    %58 = arith.divf %56, %57 : vector<2x128xf32>
    %59 = vector.extract_strided_slice %58 {offsets = [0, 0], sizes = [2, 32], strides = [1, 1]} : vector<2x128xf32> to vector<2x32xf32>
    %60 = vector.extract_strided_slice %58 {offsets = [0, 32], sizes = [2, 32], strides = [1, 1]} : vector<2x128xf32> to vector<2x32xf32>
    %61 = vector.extract_strided_slice %58 {offsets = [0, 64], sizes = [2, 32], strides = [1, 1]} : vector<2x128xf32> to vector<2x32xf32>
    %cst_21 = arith.constant 2.000000e+00 : f32
    %62 = vector.broadcast %cst_21 : f32 to vector<2x32xf32>
    %63 = arith.mulf %62, %61 : vector<2x32xf32>
    %cst_22 = arith.constant 1.000000e+00 : f32
    %64 = vector.broadcast %cst_22 : f32 to vector<2x32xf32>
    %65 = arith.subf %63, %64 : vector<2x32xf32>
    %66 = vector.extract_strided_slice %58 {offsets = [0, 96], sizes = [2, 32], strides = [1, 1]} : vector<2x128xf32> to vector<2x32xf32>
    %67 = arith.mulf %60, %48 : vector<2x32xf32>
    %68 = arith.mulf %59, %65 : vector<2x32xf32>
    %69 = arith.addf %67, %68 : vector<2x32xf32>
    %70 = math.tanh %69 : vector<2x32xf32>
    %71 = arith.mulf %66, %70 : vector<2x32xf32>
    %72 = vector.extract_strided_slice %5 {offsets = [6, 0], sizes = [2, 128], strides = [1, 1]} : vector<16x128xf32> to vector<2x128xf32>
    %cst_23 = arith.constant dense<0.000000e+00> : vector<2x128xf32>
    %73 = tpu.matmul %71, %6, %cst_23 {dimension_numbers = #tpu.dot_dimension_numbers<[1], [0], [0], [1], [0, 0, 1, 1], [], []>} : vector<2x32xf32>, vector<32x128xf32>, vector<2x128xf32> -> vector<2x128xf32>
    %74 = arith.addf %72, %73 : vector<2x128xf32>
    %75 = arith.negf %74 : vector<2x128xf32>
    %76 = math.exp %75 : vector<2x128xf32>
    %cst_24 = arith.constant 1.000000e+00 : f32
    %77 = vector.broadcast %cst_24 : f32 to vector<2x128xf32>
    %78 = arith.addf %77, %76 : vector<2x128xf32>
    %79 = arith.divf %77, %78 : vector<2x128xf32>
    %80 = vector.extract_strided_slice %79 {offsets = [0, 0], sizes = [2, 32], strides = [1, 1]} : vector<2x128xf32> to vector<2x32xf32>
    %81 = vector.extract_strided_slice %79 {offsets = [0, 32], sizes = [2, 32], strides = [1, 1]} : vector<2x128xf32> to vector<2x32xf32>
    %82 = vector.extract_strided_slice %79 {offsets = [0, 64], sizes = [2, 32], strides = [1, 1]} : vector<2x128xf32> to vector<2x32xf32>
    %cst_25 = arith.constant 2.000000e+00 : f32
    %83 = vector.broadcast %cst_25 : f32 to vector<2x32xf32>
    %84 = arith.mulf %83, %82 : vector<2x32xf32>
    %cst_26 = arith.constant 1.000000e+00 : f32
    %85 = vector.broadcast %cst_26 : f32 to vector<2x32xf32>
    %86 = arith.subf %84, %85 : vector<2x32xf32>
    %87 = vector.extract_strided_slice %79 {offsets = [0, 96], sizes = [2, 32], strides = [1, 1]} : vector<2x128xf32> to vector<2x32xf32>
    %88 = arith.mulf %81, %69 : vector<2x32xf32>
    %89 = arith.mulf %80, %86 : vector<2x32xf32>
    %90 = arith.addf %88, %89 : vector<2x32xf32>
    %91 = math.tanh %90 : vector<2x32xf32>
    %92 = arith.mulf %87, %91 : vector<2x32xf32>
    %93 = vector.extract_strided_slice %5 {offsets = [8, 0], sizes = [2, 128], strides = [1, 1]} : vector<16x128xf32> to vector<2x128xf32>
    %cst_27 = arith.constant dense<0.000000e+00> : vector<2x128xf32>
    %94 = tpu.matmul %92, %6, %cst_27 {dimension_numbers = #tpu.dot_dimension_numbers<[1], [0], [0], [1], [0, 0, 1, 1], [], []>} : vector<2x32xf32>, vector<32x128xf32>, vector<2x128xf32> -> vector<2x128xf32>
    %95 = arith.addf %93, %94 : vector<2x128xf32>
    %96 = arith.negf %95 : vector<2x128xf32>
    %97 = math.exp %96 : vector<2x128xf32>
    %cst_28 = arith.constant 1.000000e+00 : f32
    %98 = vector.broadcast %cst_28 : f32 to vector<2x128xf32>
    %99 = arith.addf %98, %97 : vector<2x128xf32>
    %100 = arith.divf %98, %99 : vector<2x128xf32>
    %101 = vector.extract_strided_slice %100 {offsets = [0, 0], sizes = [2, 32], strides = [1, 1]} : vector<2x128xf32> to vector<2x32xf32>
    %102 = vector.extract_strided_slice %100 {offsets = [0, 32], sizes = [2, 32], strides = [1, 1]} : vector<2x128xf32> to vector<2x32xf32>
    %103 = vector.extract_strided_slice %100 {offsets = [0, 64], sizes = [2, 32], strides = [1, 1]} : vector<2x128xf32> to vector<2x32xf32>
    %cst_29 = arith.constant 2.000000e+00 : f32
    %104 = vector.broadcast %cst_29 : f32 to vector<2x32xf32>
    %105 = arith.mulf %104, %103 : vector<2x32xf32>
    %cst_30 = arith.constant 1.000000e+00 : f32
    %106 = vector.broadcast %cst_30 : f32 to vector<2x32xf32>
    %107 = arith.subf %105, %106 : vector<2x32xf32>
    %108 = vector.extract_strided_slice %100 {offsets = [0, 96], sizes = [2, 32], strides = [1, 1]} : vector<2x128xf32> to vector<2x32xf32>
    %109 = arith.mulf %102, %90 : vector<2x32xf32>
    %110 = arith.mulf %101, %107 : vector<2x32xf32>
    %111 = arith.addf %109, %110 : vector<2x32xf32>
    %112 = math.tanh %111 : vector<2x32xf32>
    %113 = arith.mulf %108, %112 : vector<2x32xf32>
    %114 = vector.extract_strided_slice %5 {offsets = [10, 0], sizes = [2, 128], strides = [1, 1]} : vector<16x128xf32> to vector<2x128xf32>
    %cst_31 = arith.constant dense<0.000000e+00> : vector<2x128xf32>
    %115 = tpu.matmul %113, %6, %cst_31 {dimension_numbers = #tpu.dot_dimension_numbers<[1], [0], [0], [1], [0, 0, 1, 1], [], []>} : vector<2x32xf32>, vector<32x128xf32>, vector<2x128xf32> -> vector<2x128xf32>
    %116 = arith.addf %114, %115 : vector<2x128xf32>
    %117 = arith.negf %116 : vector<2x128xf32>
    %118 = math.exp %117 : vector<2x128xf32>
    %cst_32 = arith.constant 1.000000e+00 : f32
    %119 = vector.broadcast %cst_32 : f32 to vector<2x128xf32>
    %120 = arith.addf %119, %118 : vector<2x128xf32>
    %121 = arith.divf %119, %120 : vector<2x128xf32>
    %122 = vector.extract_strided_slice %121 {offsets = [0, 0], sizes = [2, 32], strides = [1, 1]} : vector<2x128xf32> to vector<2x32xf32>
    %123 = vector.extract_strided_slice %121 {offsets = [0, 32], sizes = [2, 32], strides = [1, 1]} : vector<2x128xf32> to vector<2x32xf32>
    %124 = vector.extract_strided_slice %121 {offsets = [0, 64], sizes = [2, 32], strides = [1, 1]} : vector<2x128xf32> to vector<2x32xf32>
    %cst_33 = arith.constant 2.000000e+00 : f32
    %125 = vector.broadcast %cst_33 : f32 to vector<2x32xf32>
    %126 = arith.mulf %125, %124 : vector<2x32xf32>
    %cst_34 = arith.constant 1.000000e+00 : f32
    %127 = vector.broadcast %cst_34 : f32 to vector<2x32xf32>
    %128 = arith.subf %126, %127 : vector<2x32xf32>
    %129 = vector.extract_strided_slice %121 {offsets = [0, 96], sizes = [2, 32], strides = [1, 1]} : vector<2x128xf32> to vector<2x32xf32>
    %130 = arith.mulf %123, %111 : vector<2x32xf32>
    %131 = arith.mulf %122, %128 : vector<2x32xf32>
    %132 = arith.addf %130, %131 : vector<2x32xf32>
    %133 = math.tanh %132 : vector<2x32xf32>
    %134 = arith.mulf %129, %133 : vector<2x32xf32>
    %135 = vector.extract_strided_slice %5 {offsets = [12, 0], sizes = [2, 128], strides = [1, 1]} : vector<16x128xf32> to vector<2x128xf32>
    %cst_35 = arith.constant dense<0.000000e+00> : vector<2x128xf32>
    %136 = tpu.matmul %134, %6, %cst_35 {dimension_numbers = #tpu.dot_dimension_numbers<[1], [0], [0], [1], [0, 0, 1, 1], [], []>} : vector<2x32xf32>, vector<32x128xf32>, vector<2x128xf32> -> vector<2x128xf32>
    %137 = arith.addf %135, %136 : vector<2x128xf32>
    %138 = arith.negf %137 : vector<2x128xf32>
    %139 = math.exp %138 : vector<2x128xf32>
    %cst_36 = arith.constant 1.000000e+00 : f32
    %140 = vector.broadcast %cst_36 : f32 to vector<2x128xf32>
    %141 = arith.addf %140, %139 : vector<2x128xf32>
    %142 = arith.divf %140, %141 : vector<2x128xf32>
    %143 = vector.extract_strided_slice %142 {offsets = [0, 0], sizes = [2, 32], strides = [1, 1]} : vector<2x128xf32> to vector<2x32xf32>
    %144 = vector.extract_strided_slice %142 {offsets = [0, 32], sizes = [2, 32], strides = [1, 1]} : vector<2x128xf32> to vector<2x32xf32>
    %145 = vector.extract_strided_slice %142 {offsets = [0, 64], sizes = [2, 32], strides = [1, 1]} : vector<2x128xf32> to vector<2x32xf32>
    %cst_37 = arith.constant 2.000000e+00 : f32
    %146 = vector.broadcast %cst_37 : f32 to vector<2x32xf32>
    %147 = arith.mulf %146, %145 : vector<2x32xf32>
    %cst_38 = arith.constant 1.000000e+00 : f32
    %148 = vector.broadcast %cst_38 : f32 to vector<2x32xf32>
    %149 = arith.subf %147, %148 : vector<2x32xf32>
    %150 = vector.extract_strided_slice %142 {offsets = [0, 96], sizes = [2, 32], strides = [1, 1]} : vector<2x128xf32> to vector<2x32xf32>
    %151 = arith.mulf %144, %132 : vector<2x32xf32>
    %152 = arith.mulf %143, %149 : vector<2x32xf32>
    %153 = arith.addf %151, %152 : vector<2x32xf32>
    %154 = math.tanh %153 : vector<2x32xf32>
    %155 = arith.mulf %150, %154 : vector<2x32xf32>
    %156 = vector.extract_strided_slice %5 {offsets = [14, 0], sizes = [2, 128], strides = [1, 1]} : vector<16x128xf32> to vector<2x128xf32>
    %cst_39 = arith.constant dense<0.000000e+00> : vector<2x128xf32>
    %157 = tpu.matmul %155, %6, %cst_39 {dimension_numbers = #tpu.dot_dimension_numbers<[1], [0], [0], [1], [0, 0, 1, 1], [], []>} : vector<2x32xf32>, vector<32x128xf32>, vector<2x128xf32> -> vector<2x128xf32>
    %158 = arith.addf %156, %157 : vector<2x128xf32>
    %159 = arith.negf %158 : vector<2x128xf32>
    %160 = math.exp %159 : vector<2x128xf32>
    %cst_40 = arith.constant 1.000000e+00 : f32
    %161 = vector.broadcast %cst_40 : f32 to vector<2x128xf32>
    %162 = arith.addf %161, %160 : vector<2x128xf32>
    %163 = arith.divf %161, %162 : vector<2x128xf32>
    %164 = vector.extract_strided_slice %163 {offsets = [0, 0], sizes = [2, 32], strides = [1, 1]} : vector<2x128xf32> to vector<2x32xf32>
    %165 = vector.extract_strided_slice %163 {offsets = [0, 32], sizes = [2, 32], strides = [1, 1]} : vector<2x128xf32> to vector<2x32xf32>
    %166 = vector.extract_strided_slice %163 {offsets = [0, 64], sizes = [2, 32], strides = [1, 1]} : vector<2x128xf32> to vector<2x32xf32>
    %cst_41 = arith.constant 2.000000e+00 : f32
    %167 = vector.broadcast %cst_41 : f32 to vector<2x32xf32>
    %168 = arith.mulf %167, %166 : vector<2x32xf32>
    %cst_42 = arith.constant 1.000000e+00 : f32
    %169 = vector.broadcast %cst_42 : f32 to vector<2x32xf32>
    %170 = arith.subf %168, %169 : vector<2x32xf32>
    %171 = vector.extract_strided_slice %163 {offsets = [0, 96], sizes = [2, 32], strides = [1, 1]} : vector<2x128xf32> to vector<2x32xf32>
    %172 = arith.mulf %165, %153 : vector<2x32xf32>
    %173 = arith.mulf %164, %170 : vector<2x32xf32>
    %174 = arith.addf %172, %173 : vector<2x32xf32>
    %175 = math.tanh %174 : vector<2x32xf32>
    %176 = arith.mulf %171, %175 : vector<2x32xf32>
    %c0_43 = arith.constant 0 : index
    %c0_44 = arith.constant 0 : index
    %177 = vector.load %arg12[%c0_43, %c0_44] : memref<4x32xf32, #tpu.memory_space<vmem>>, vector<2x32xf32>
    tpu.vector_store %arg12[%c0_43, %c0_44], %176 {strides = array<i32>} : memref<4x32xf32, #tpu.memory_space<vmem>>, vector<2x32xf32>,
    %c2 = arith.constant 2 : index
    %c0_45 = arith.constant 0 : index
    %178 = vector.load %arg12[%c2, %c0_45] : memref<4x32xf32, #tpu.memory_space<vmem>>, vector<2x32xf32>
    tpu.vector_store %arg12[%c2, %c0_45], %174 {strides = array<i32>} : memref<4x32xf32, #tpu.memory_space<vmem>>, vector<2x32xf32>,
    %179 = tpu.concatenate %29, %50, %71, %92, %113, %134, %155, %176 in 0 : vector<2x32xf32>, vector<2x32xf32>, vector<2x32xf32>, vector<2x32xf32>, vector<2x32xf32>, vector<2x32xf32>, vector<2x32xf32>, vector<2x32xf32> -> vector<16x32xf32>
    %c0_46 = arith.constant 0 : index
    %c0_47 = arith.constant 0 : index
    %180 = vector.load %arg3[%c0_46, %c0_47] : memref<16x32xf32, #tpu.memory_space<vmem>>, vector<16x32xf32>
    %cst_48 = arith.constant dense<0.000000e+00> : vector<16x16xf32>
    %181 = tpu.matmul %179, %180, %cst_48 {dimension_numbers = #tpu.dot_dimension_numbers<[1], [1], [0], [0], [0, 0, 1, 0], [], []>} : vector<16x32xf32>, vector<16x32xf32>, vector<16x16xf32> -> vector<16x16xf32>
    %182 = tpu.iota {dimensions = array<i32: 0>} : vector<16x16xi32>
    %c2_i32 = arith.constant 2 : i32
    %c0_i32 = arith.constant 0 : i32
    %183 = arith.cmpi eq, %c2_i32, %c0_i32 : i32
    %c1_i32 = arith.constant 1 : i32
    %184 = arith.select %183, %c1_i32, %c2_i32 : i32
    %185 = vector.broadcast %184 : i32 to vector<16x16xi32>
    %186 = arith.remsi %182, %185 : vector<16x16xi32>
    %c0_i32_49 = arith.constant 0 : i32
    %187 = vector.broadcast %c0_i32_49 : i32 to vector<16x16xi32>
    %188 = arith.cmpi ne, %186, %187 : vector<16x16xi32>
    %c0_i32_50 = arith.constant 0 : i32
    %189 = vector.broadcast %c0_i32_50 : i32 to vector<16x16xi32>
    %190 = arith.cmpi slt, %186, %189 : vector<16x16xi32>
    %c0_i32_51 = arith.constant 0 : i32
    %191 = arith.cmpi slt, %184, %c0_i32_51 : i32
    %192 = vector.broadcast %191 : i1 to vector<16x16xi1>
    %193 = vector.broadcast %192 : vector<16x16xi1> to vector<16x16xi1>
    %194 = arith.xori %190, %193 : vector<16x16xi1>
    %195 = arith.andi %194, %188 : vector<16x16xi1>
    %196 = vector.broadcast %184 : i32 to vector<16x16xi32>
    %197 = arith.addi %186, %196 : vector<16x16xi32>
    %198 = arith.select %195, %197, %186 : vector<16x16xi1>, vector<16x16xi32>
    %199 = tpu.iota {dimensions = array<i32: 1>} : vector<16x16xi32>
    %c2_i32_52 = arith.constant 2 : i32
    %c0_i32_53 = arith.constant 0 : i32
    %200 = arith.cmpi eq, %c2_i32_52, %c0_i32_53 : i32
    %c1_i32_54 = arith.constant 1 : i32
    %201 = arith.select %200, %c1_i32_54, %c2_i32_52 : i32
    %202 = vector.broadcast %201 : i32 to vector<16x16xi32>
    %203 = arith.remsi %199, %202 : vector<16x16xi32>
    %c0_i32_55 = arith.constant 0 : i32
    %204 = vector.broadcast %c0_i32_55 : i32 to vector<16x16xi32>
    %205 = arith.cmpi ne, %203, %204 : vector<16x16xi32>
    %c0_i32_56 = arith.constant 0 : i32
    %206 = vector.broadcast %c0_i32_56 : i32 to vector<16x16xi32>
    %207 = arith.cmpi slt, %203, %206 : vector<16x16xi32>
    %c0_i32_57 = arith.constant 0 : i32
    %208 = arith.cmpi slt, %201, %c0_i32_57 : i32
    %209 = vector.broadcast %208 : i1 to vector<16x16xi1>
    %210 = vector.broadcast %209 : vector<16x16xi1> to vector<16x16xi1>
    %211 = arith.xori %207, %210 : vector<16x16xi1>
    %212 = arith.andi %211, %205 : vector<16x16xi1>
    %213 = vector.broadcast %201 : i32 to vector<16x16xi32>
    %214 = arith.addi %203, %213 : vector<16x16xi32>
    %215 = arith.select %212, %214, %203 : vector<16x16xi1>, vector<16x16xi32>
    %216 = arith.cmpi eq, %198, %215 : vector<16x16xi32>
    %cst_58 = arith.constant -1.000000e+30 : f32
    %217 = vector.broadcast %cst_58 : f32 to vector<16x16xf32>
    %218 = arith.select %216, %181, %217 : vector<16x16xi1>, vector<16x16xf32>
    %cst_59 = arith.constant dense<0xFF800000> : vector<16xf32>
    %219 = vector.multi_reduction <maximumf>, %218, %cst_59 [1] : vector<16x16xf32> to vector<16xf32>
    %220 = vector.shape_cast %219 : vector<16xf32> to vector<16x1xf32>
    %221 = vector.broadcast %220 : vector<16x1xf32> to vector<16x16xf32>
    %222 = arith.subf %218, %221 : vector<16x16xf32>
    %223 = math.exp %222 : vector<16x16xf32>
    %cst_60 = arith.constant dense<0.000000e+00> : vector<16xf32>
    %224 = vector.multi_reduction <add>, %223, %cst_60 [1] : vector<16x16xf32> to vector<16xf32>
    %225 = vector.shape_cast %224 : vector<16xf32> to vector<16x1xf32>
    %226 = vector.broadcast %225 : vector<16x1xf32> to vector<16x16xf32>
    %227 = arith.divf %223, %226 : vector<16x16xf32>
    %cst_61 = arith.constant dense<0.000000e+00> : vector<16x32xf32>
    %228 = tpu.matmul %227, %180, %cst_61 {dimension_numbers = #tpu.dot_dimension_numbers<[1], [0], [0], [1], [0, 0, 1, 1], [], []>} : vector<16x16xf32>, vector<16x32xf32>, vector<16x32xf32> -> vector<16x32xf32>
    %c0_62 = arith.constant 0 : index
    %c0_63 = arith.constant 0 : index
    %229 = vector.load %arg7[%c0_62, %c0_63] : memref<32x32xf32, #tpu.memory_space<vmem>>, vector<32x32xf32>
    %cst_64 = arith.constant dense<0.000000e+00> : vector<16x32xf32>
    %230 = tpu.matmul %179, %229, %cst_64 {dimension_numbers = #tpu.dot_dimension_numbers<[1], [0], [0], [1], [0, 0, 1, 1], [], []>} : vector<16x32xf32>, vector<32x32xf32>, vector<16x32xf32> -> vector<16x32xf32>
    %c0_65 = arith.constant 0 : index
    %c0_66 = arith.constant 0 : index
    %231 = vector.load %arg8[%c0_65, %c0_66] : memref<32x32xf32, #tpu.memory_space<vmem>>, vector<32x32xf32>
    %cst_67 = arith.constant dense<0.000000e+00> : vector<16x32xf32>
    %232 = tpu.matmul %228, %231, %cst_67 {dimension_numbers = #tpu.dot_dimension_numbers<[1], [0], [0], [1], [0, 0, 1, 1], [], []>} : vector<16x32xf32>, vector<32x32xf32>, vector<16x32xf32> -> vector<16x32xf32>
    %233 = arith.addf %230, %232 : vector<16x32xf32>
    %234 = math.tanh %233 : vector<16x32xf32>
    %c0_68 = arith.constant 0 : index
    %c0_69 = arith.constant 0 : index
    %235 = vector.load %arg9[%c0_68, %c0_69] : memref<32x8xf32, #tpu.memory_space<vmem>>, vector<32x8xf32>
    %cst_70 = arith.constant dense<0.000000e+00> : vector<16x8xf32>
    %236 = tpu.matmul %234, %235, %cst_70 {dimension_numbers = #tpu.dot_dimension_numbers<[1], [0], [0], [1], [0, 0, 1, 1], [], []>} : vector<16x32xf32>, vector<32x8xf32>, vector<16x8xf32> -> vector<16x8xf32>
    %c0_71 = arith.constant 0 : index
    %c0_72 = arith.constant 0 : index
    %237 = vector.load %arg10[%c0_71, %c0_72] : memref<1x8xf32, #tpu.memory_space<vmem>>, vector<1x8xf32>
    %238 = vector.broadcast %237 : vector<1x8xf32> to vector<16x8xf32>
    %239 = arith.addf %236, %238 : vector<16x8xf32>
    %c0_73 = arith.constant 0 : index
    %c0_74 = arith.constant 0 : index
    %240 = vector.load %arg11[%c0_73, %c0_74] : memref<16x8xf32, #tpu.memory_space<vmem>>, vector<16x8xf32>
    tpu.vector_store %arg11[%c0_73, %c0_74], %239 {strides = array<i32>} : memref<16x8xf32, #tpu.memory_space<vmem>>, vector<16x8xf32>,
    return
  }
}

</mosaic_0001>

<llo_original>
// kernel: seq_regressor_forward.1
$region0: #{seq_regressor_forward.1}
  #allocation0 [shape = 'u32[]', space=smem, size = 0x4, offset = 0x4, fixed_abs, tag = 'smem constant byte address 0x4 - core index']
  #allocation1 [shape = 'u32[72,128]{1,0:T(1,128)}', space=vmem, size = 0x9000, scoped, tag = 'internal scratch']
  %s0 = inlined_call_operand.vmem [shape: f32[16,32], index: 0, kind: input, shape index: {}]
  %s1 = inlined_call_operand.vmem [shape: f32[2,32], index: 1, kind: input, shape index: {}]
  %s2 = inlined_call_operand.vmem [shape: f32[2,32], index: 2, kind: input, shape index: {}]
  %s3 = inlined_call_operand.vmem [shape: f32[16,32], index: 3, kind: input, shape index: {}]
  %s4 = inlined_call_operand.vmem [shape: f32[32,128], index: 4, kind: input, shape index: {}]
  %s5 = inlined_call_operand.vmem [shape: f32[32,128], index: 5, kind: input, shape index: {}]
  %s6 = inlined_call_operand.vmem [shape: f32[1,128], index: 6, kind: input, shape index: {}]
  %s7 = inlined_call_operand.vmem [shape: f32[32,32], index: 7, kind: input, shape index: {}]
  %s8 = inlined_call_operand.vmem [shape: f32[32,32], index: 8, kind: input, shape index: {}]
  %s9 = inlined_call_operand.vmem [shape: f32[32,8], index: 9, kind: input, shape index: {}]
  %s10 = inlined_call_operand.vmem [shape: f32[1,8], index: 10, kind: input, shape index: {}]
  %s11 = inlined_call_operand.hbm [shape: f32[16,8], index: 11, kind: output, shape index: {0}]
  %s12 = inlined_call_operand.vmem [shape: f32[4,32], index: 12, kind: output, shape index: {1}]
  %13 = xla_tuple %s11, %s12
  %s14 = sld [smem:[#allocation0]]
  $region62: #{seq_regressor_forward.1} parent=0
    _
  %s16 = ssub.s32 1, %s14
  %s17 = scalar_select 0, %s16, %s14
  $region1: #{seq_regressor_forward.1} parent=0
    #allocation2 [shape = 'u8[8192]{0}', space=vmem, size = 0x2000, scoped, tag = 'output window, operand 0, single buffered']
    #allocation3 [shape = 's32[1]{0}', space=sflag, size = 0x4, scoped, tag = 'scoped memory for seq_regressor_forward.1']
    %18 = vsyncpa [#allocation3], 0
    // Predicated region
    $region2: #{seq_regressor_forward.1} parent=1 // pred_check
      _
    $region3: #{seq_regressor_forward.1} parent=1 // pred_check_branch
      %20 = sbr.rel (0) target = $region5
    $region4: #{seq_regressor_forward.1} parent=1 // pred_region
      _
    $region5: #{seq_regressor_forward.1} parent=1 // pred_fallthru
      _
    // Predicated region
    $region6: #{seq_regressor_forward.1} parent=1 // pred_check
      _
    $region7: #{seq_regressor_forward.1} parent=1 // pred_check_branch
      %22 = sbr.rel (0) target = $region9
    $region8: #{seq_regressor_forward.1} parent=1 // pred_region
      _
    $region9: #{seq_regressor_forward.1} parent=1 // pred_fallthru
      _
    // Predicated region
    $region10: #{seq_regressor_forward.1} parent=1 // pred_check
      _
    $region11: #{seq_regressor_forward.1} parent=1 // pred_check_branch
      %24 = sbr.rel (0) target = $region13
    $region12: #{seq_regressor_forward.1} parent=1 // pred_region
      _
    $region13: #{seq_regressor_forward.1} parent=1 // pred_fallthru
      _
    // Predicated region
    $region14: #{seq_regressor_forward.1} parent=1 // pred_check
      _
    $region15: #{seq_regressor_forward.1} parent=1 // pred_check_branch
      %26 = sbr.rel (0) target = $region17
    $region16: #{seq_regressor_forward.1} parent=1 // pred_region
      _
    $region17: #{seq_regressor_forward.1} parent=1 // pred_fallthru
      _
    // Predicated region
    $region18: #{seq_regressor_forward.1} parent=1 // pred_check
      _
    $region19: #{seq_regressor_forward.1} parent=1 // pred_check_branch
      %28 = sbr.rel (0) target = $region21
    $region20: #{seq_regressor_forward.1} parent=1 // pred_region
      _
    $region21: #{seq_regressor_forward.1} parent=1 // pred_fallthru
      _
    // Predicated region
    $region22: #{seq_regressor_forward.1} parent=1 // pred_check
      _
    $region23: #{seq_regressor_forward.1} parent=1 // pred_check_branch
      %30 = sbr.rel (0) target = $region25
    $region24: #{seq_regressor_forward.1} parent=1 // pred_region
      _
    $region25: #{seq_regressor_forward.1} parent=1 // pred_fallthru
      _
    // Predicated region
    $region26: #{seq_regressor_forward.1} parent=1 // pred_check
      _
    $region27: #{seq_regressor_forward.1} parent=1 // pred_check_branch
      %32 = sbr.rel (0) target = $region29
    $region28: #{seq_regressor_forward.1} parent=1 // pred_region
      _
    $region29: #{seq_regressor_forward.1} parent=1 // pred_fallthru
      _
    // Predicated region
    $region30: #{seq_regressor_forward.1} parent=1 // pred_check
      _
    $region31: #{seq_regressor_forward.1} parent=1 // pred_check_branch
      %34 = sbr.rel (0) target = $region33
    $region32: #{seq_regressor_forward.1} parent=1 // pred_region
      _
    $region33: #{seq_regressor_forward.1} parent=1 // pred_fallthru
      _
    // Predicated region
    $region34: #{seq_regressor_forward.1} parent=1 // pred_check
      _
    $region35: #{seq_regressor_forward.1} parent=1 // pred_check_branch
      %36 = sbr.rel (0) target = $region37
    $region36: #{seq_regressor_forward.1} parent=1 // pred_region
      _
    $region37: #{seq_regressor_forward.1} parent=1 // pred_fallthru
      _
    // Predicated region
    $region38: #{seq_regressor_forward.1} parent=1 // pred_check
      _
    $region39: #{seq_regressor_forward.1} parent=1 // pred_check_branch
      %38 = sbr.rel (0) target = $region41
    $region40: #{seq_regressor_forward.1} parent=1 // pred_region
      _
    $region41: #{seq_regressor_forward.1} parent=1 // pred_fallthru
      _
    // Predicated region
    $region42: #{seq_regressor_forward.1} parent=1 // pred_check
      _
    $region43: #{seq_regressor_forward.1} parent=1 // pred_check_branch
      %40 = sbr.rel (0) target = $region45
    $region44: #{seq_regressor_forward.1} parent=1 // pred_region
      _
    $region45: #{seq_regressor_forward.1} parent=1 // pred_fallthru
      _
    %v41 = vld [vmem:[%s0] sm:$0xff]
    %v42 = vld [vmem:[%s0 + $0x8] sm:$0xff]
    %v43 = vld [vmem:[%s4] sm:$0xff]
    %v44 = vld [vmem:[%s4 + $0x8] sm:$0xff]
    %v45 = vld [vmem:[%s4 + $0x10] sm:$0xff]
    %v46 = vld [vmem:[%s4 + $0x18] sm:$0xff]
    %v47 = vld [vmem:[%s6] sm:$0x1]
    %v49 = vperm.slane %v47, 0
    %vm51 = vcmask 261120
    %v53 = vsel %vm51, %v41, 0
    %v56 = vsel %vm51, %v42, 0
    %58 = vmatpush.msra.mxu0 0.0
    %59 = vmatpush.msra.mxu0 0.0
    %60 = vmatpush.msra.mxu0 0.0
    %61 = vmatpush.msra.mxu0 0.0
    %62 = vmatpush.msra.mxu0 0.0
    %63 = vmatpush.msra.mxu0 0.0
    %64 = vmatpush.msra.mxu0 0.0
    %65 = vmatpush.msra.mxu0 0.0
    %66 = vmatpush.msra.mxu0 0.0
    %67 = vmatpush.msra.mxu0 0.0
    %68 = vmatpush.msra.mxu0 0.0
    %69 = vmatpush.msra.mxu0 0.0
    %70 = vmatpush.msra.mxu0 %v46
    %71 = vmatpush.msra.mxu0 %v45
    %72 = vmatpush.msra.mxu0 %v44
    %73 = vmatpush.msra.mxu0 %v43
    %74 = vmatmul.f32.gmra.mxu0 %v53
    %v75 = vpop.f32.mrf.mxu0
    %v76 = vadd.f32 %v49, %v75
    %77 = vmatmul.f32.gmra.mxu0 %v56
    %v78 = vpop.f32.mrf.mxu0
    %v79 = vadd.f32 %v49, %v78
    %80 = vdwg.mxu0
    %v81 = vld [vmem:[%s5] sm:$0xff]
    %v82 = vld [vmem:[%s5 + $0x8] sm:$0xff]
    %v83 = vld [vmem:[%s5 + $0x10] sm:$0xff]
    %v84 = vld [vmem:[%s5 + $0x18] sm:$0xff]
    %v85 = vld [vmem:[%s1] sm:$0x3]
    %v86 = vld [vmem:[%s2] sm:$0x3]
    %v88 = vsel %vm51, %v85, 0
    %90 = vmatpush.msra.mxu0 0.0
    %91 = vmatpush.msra.mxu0 0.0
    %92 = vmatpush.msra.mxu0 0.0
    %93 = vmatpush.msra.mxu0 0.0
    %94 = vmatpush.msra.mxu0 0.0
    %95 = vmatpush.msra.mxu0 0.0
    %96 = vmatpush.msra.mxu0 0.0
    %97 = vmatpush.msra.mxu0 0.0
    %98 = vmatpush.msra.mxu0 0.0
    %99 = vmatpush.msra.mxu0 0.0
    %100 = vmatpush.msra.mxu0 0.0
    %101 = vmatpush.msra.mxu0 0.0
    %102 = vmatpush.msra.mxu0 %v84
    %103 = vmatpush.msra.mxu0 %v83
    %104 = vmatpush.msra.mxu0 %v82
    %105 = vmatpush.msra.mxu0 %v81
    %106 = vmatmul.f32.gmra.mxu0 %v88
    %v107 = vpop.f32.mrf.mxu0
    %v108 = vadd.f32 0.0, %v107
    %109 = vdwg.mxu0
    %v110 = vadd.f32 %v76, %v108
    %v111 = vxor.u32 %v110, 2147483648
    %v112 = vmul.f32 %v111, 1.442695
    %v113 = vpow.pop %v112
    %v114 = vadd.f32 %v113, 1.0
    %v115 = vrcp.pop %v114
    %v116 = vmul.f32 %v114, %v115
    %v117 = vsub.f32 1.0, %v116
    %v118 = vmul.f32 %v115, %v117
    %v119 = vadd.f32 %v115, %v118
    %vm120 = vweird.f32 %v114
    %vm121 = vweird.f32 %v115
    %vm122 = vmor %vm120, %vm121
    %v123 = vsel %vm122, %v115, %v119
    %v124 = vand.u32 2147483647, %v114
    %vm125 = vcmp.eq.f32.partialorder %v124, 8.507059e+37
    %v126 = vand.u32 %v114, 2147483648
    %v127 = vor.u32 1.1754944e-38, %v126
    %v128 = vsel %vm125, %v127, %v123
    %v129 = vmul.f32 1.0, %v128
    %v130 = vmul.f32 %v129, 2.0
    %v131 = vsub.f32 %v130, 1.0
    %133 = vrot.lane.b32.xlu0 %v86, 32
    %v134 = vpop.permute.xlu0 %133
    %v136 = vmul.f32 %v129, %v134
    %138 = vrot.lane.b32.xlu0 %v131, 64
    %v139 = vpop.permute.xlu0 %138
    %v141 = vmul.f32 %v129, %v139
    %143 = vrot.lane.b32.xlu0 %v141, 32
    %v144 = vpop.permute.xlu0 %143
    %v146 = vadd.f32 %v136, %v144
    %v147 = vtanh.pop %v146
    %149 = vrot.lane.b32.xlu0 %v147, 64
    %v150 = vpop.permute.xlu0 %149
    %v152 = vmul.f32 %v129, %v150
    %154 = vrot.lane.b32.xlu0 %v152, 32
    %v155 = vpop.permute.xlu0 %154
    %v156 = vsel %vm51, %v155, 0
    %158 = vmatpush.msra.mxu0 0.0
    %159 = vmatpush.msra.mxu0 0.0
    %160 = vmatpush.msra.mxu0 0.0
    %161 = vmatpush.msra.mxu0 0.0
    %162 = vmatpush.msra.mxu0 0.0
    %163 = vmatpush.msra.mxu0 0.0
    %164 = vmatpush.msra.mxu0 0.0
    %165 = vmatpush.msra.mxu0 0.0
    %166 = vmatpush.msra.mxu0 0.0
    %167 = vmatpush.msra.mxu0 0.0
    %168 = vmatpush.msra.mxu0 0.0
    %169 = vmatpush.msra.mxu0 0.0
    %170 = vmatpush.msra.mxu0 %v84
    %171 = vmatpush.msra.mxu0 %v83
    %172 = vmatpush.msra.mxu0 %v82
    %173 = vmatpush.msra.mxu0 %v81
    %174 = vmatmul.f32.gmra.mxu0 %v156
    %v175 = vpop.f32.mrf.mxu0
    %v176 = vadd.f32 0.0, %v175
    %177 = vdwg.mxu0
    %v179 = vrot.slane %v176, 6
    %v181 = vadd.f32 %v76, %v179
    %v182 = vxor.u32 %v181, 2147483648
    %v183 = vmul.f32 %v182, 1.442695
    %v184 = vpow.pop %v183
    %v185 = vadd.f32 %v184, 1.0
    %v186 = vrcp.pop %v185
    %v187 = vmul.f32 %v185, %v186
    %v188 = vsub.f32 1.0, %v187
    %v189 = vmul.f32 %v186, %v188
    %v190 = vadd.f32 %v186, %v189
    %vm191 = vweird.f32 %v185
    %vm192 = vweird.f32 %v186
    %vm193 = vmor %vm191, %vm192
    %v194 = vsel %vm193, %v186, %v190
    %v195 = vand.u32 2147483647, %v185
    %vm196 = vcmp.eq.f32.partialorder %v195, 8.507059e+37
    %v197 = vand.u32 %v185, 2147483648
    %v198 = vor.u32 1.1754944e-38, %v197
    %v199 = vsel %vm196, %v198, %v194
    %v200 = vmul.f32 1.0, %v199
    %v201 = vmul.f32 %v200, 2.0
    %v202 = vsub.f32 %v201, 1.0
    %v204 = vrot.slane %v146, 6
    %v206 = vmul.f32 %v200, %v204
    %208 = vrot.lane.b32.xlu0 %v202, 64
    %v209 = vpop.permute.xlu0 %208
    %v211 = vmul.f32 %v200, %v209
    %213 = vrot.lane.b32.xlu0 %v211, 32
    %v214 = vpop.permute.xlu0 %213
    %v216 = vadd.f32 %v206, %v214
    %v217 = vtanh.pop %v216
    %219 = vrot.lane.b32.xlu0 %v217, 64
    %v220 = vpop.permute.xlu0 %219
    %v222 = vmul.f32 %v200, %v220
    %v224 = vrot.slane %v222, 2
    %225 = vrot.lane.b32.xlu0 %v224, 32
    %v226 = vpop.permute.xlu0 %225
    %v227 = vsel %vm51, %v226, 0
    %229 = vmatpush.msra.mxu0 0.0
    %230 = vmatpush.msra.mxu0 0.0
    %231 = vmatpush.msra.mxu0 0.0
    %232 = vmatpush.msra.mxu0 0.0
    %233 = vmatpush.msra.mxu0 0.0
    %234 = vmatpush.msra.mxu0 0.0
    %235 = vmatpush.msra.mxu0 0.0
    %236 = vmatpush.msra.mxu0 0.0
    %237 = vmatpush.msra.mxu0 0.0
    %238 = vmatpush.msra.mxu0 0.0
    %239 = vmatpush.msra.mxu0 0.0
    %240 = vmatpush.msra.mxu0 0.0
    %241 = vmatpush.msra.mxu0 %v84
    %242 = vmatpush.msra.mxu0 %v83
    %243 = vmatpush.msra.mxu0 %v82
    %244 = vmatpush.msra.mxu0 %v81
    %245 = vmatmul.f32.gmra.mxu0 %v227
    %v246 = vpop.f32.mrf.mxu0
    %v247 = vadd.f32 0.0, %v246
    %248 = vdwg.mxu0
    %v250 = vrot.slane %v247, 4
    %v252 = vadd.f32 %v76, %v250
    %v253 = vxor.u32 %v252, 2147483648
    %v254 = vmul.f32 %v253, 1.442695
    %v255 = vpow.pop %v254
    %v256 = vadd.f32 %v255, 1.0
    %v257 = vrcp.pop %v256
    %v258 = vmul.f32 %v256, %v257
    %v259 = vsub.f32 1.0, %v258
    %v260 = vmul.f32 %v257, %v259
    %v261 = vadd.f32 %v257, %v260
    %vm262 = vweird.f32 %v256
    %vm263 = vweird.f32 %v257
    %vm264 = vmor %vm262, %vm263
    %v265 = vsel %vm264, %v257, %v261
    %v266 = vand.u32 2147483647, %v256
    %vm267 = vcmp.eq.f32.partialorder %v266, 8.507059e+37
    %v268 = vand.u32 %v256, 2147483648
    %v269 = vor.u32 1.1754944e-38, %v268
    %v270 = vsel %vm267, %v269, %v265
    %v271 = vmul.f32 1.0, %v270
    %v272 = vmul.f32 %v271, 2.0
    %v273 = vsub.f32 %v272, 1.0
    %v275 = vrot.slane %v216, 6
    %v277 = vmul.f32 %v271, %v275
    %279 = vrot.lane.b32.xlu0 %v273, 64
    %v280 = vpop.permute.xlu0 %279
    %v282 = vmul.f32 %v271, %v280
    %284 = vrot.lane.b32.xlu0 %v282, 32
    %v285 = vpop.permute.xlu0 %284
    %v287 = vadd.f32 %v277, %v285
    %v288 = vtanh.pop %v287
    %290 = vrot.lane.b32.xlu0 %v288, 64
    %v291 = vpop.permute.xlu0 %290
    %v293 = vmul.f32 %v271, %v291
    %v295 = vrot.slane %v293, 4
    %296 = vrot.lane.b32.xlu0 %v295, 32
    %v297 = vpop.permute.xlu0 %296
    %v298 = vsel %vm51, %v297, 0
    %300 = vmatpush.msra.mxu0 0.0
    %301 = vmatpush.msra.mxu0 0.0
    %302 = vmatpush.msra.mxu0 0.0
    %303 = vmatpush.msra.mxu0 0.0
    %304 = vmatpush.msra.mxu0 0.0
    %305 = vmatpush.msra.mxu0 0.0
    %306 = vmatpush.msra.mxu0 0.0
    %307 = vmatpush.msra.mxu0 0.0
    %308 = vmatpush.msra.mxu0 0.0
    %309 = vmatpush.msra.mxu0 0.0
    %310 = vmatpush.msra.mxu0 0.0
    %311 = vmatpush.msra.mxu0 0.0
    %312 = vmatpush.msra.mxu0 %v84
    %313 = vmatpush.msra.mxu0 %v83
    %314 = vmatpush.msra.mxu0 %v82
    %315 = vmatpush.msra.mxu0 %v81
    %316 = vmatmul.f32.gmra.mxu0 %v298
    %v317 = vpop.f32.mrf.mxu0
    %v318 = vadd.f32 0.0, %v317
    %319 = vdwg.mxu0
    %v321 = vrot.slane %v318, 2
    %v323 = vadd.f32 %v76, %v321
    %v324 = vxor.u32 %v323, 2147483648
    %v325 = vmul.f32 %v324, 1.442695
    %v326 = vpow.pop %v325
    %v327 = vadd.f32 %v326, 1.0
    %v328 = vrcp.pop %v327
    %v329 = vmul.f32 %v327, %v328
    %v330 = vsub.f32 1.0, %v329
    %v331 = vmul.f32 %v328, %v330
    %v332 = vadd.f32 %v328, %v331
    %vm333 = vweird.f32 %v327
    %vm334 = vweird.f32 %v328
    %vm335 = vmor %vm333, %vm334
    %v336 = vsel %vm335, %v328, %v332
    %v337 = vand.u32 2147483647, %v327
    %vm338 = vcmp.eq.f32.partialorder %v337, 8.507059e+37
    %v339 = vand.u32 %v327, 2147483648
    %v340 = vor.u32 1.1754944e-38, %v339
    %v341 = vsel %vm338, %v340, %v336
    %v342 = vmul.f32 1.0, %v341
    %v343 = vmul.f32 %v342, 2.0
    %v344 = vsub.f32 %v343, 1.0
    %v346 = vrot.slane %v287, 6
    %v348 = vmul.f32 %v342, %v346
    %350 = vrot.lane.b32.xlu0 %v344, 64
    %v351 = vpop.permute.xlu0 %350
    %v353 = vmul.f32 %v342, %v351
    %355 = vrot.lane.b32.xlu0 %v353, 32
    %v356 = vpop.permute.xlu0 %355
    %v358 = vadd.f32 %v348, %v356
    %v359 = vtanh.pop %v358
    %361 = vrot.lane.b32.xlu0 %v359, 64
    %v362 = vpop.permute.xlu0 %361
    %v364 = vmul.f32 %v342, %v362
    %v366 = vrot.slane %v364, 6
    %367 = vrot.lane.b32.xlu0 %v366, 32
    %v368 = vpop.permute.xlu0 %367
    %v369 = vsel %vm51, %v368, 0
    %371 = vmatpush.msra.mxu0 0.0
    %372 = vmatpush.msra.mxu0 0.0
    %373 = vmatpush.msra.mxu0 0.0
    %374 = vmatpush.msra.mxu0 0.0
    %375 = vmatpush.msra.mxu0 0.0
    %376 = vmatpush.msra.mxu0 0.0
    %377 = vmatpush.msra.mxu0 0.0
    %378 = vmatpush.msra.mxu0 0.0
    %379 = vmatpush.msra.mxu0 0.0
    %380 = vmatpush.msra.mxu0 0.0
    %381 = vmatpush.msra.mxu0 0.0
    %382 = vmatpush.msra.mxu0 0.0
    %383 = vmatpush.msra.mxu0 %v84
    %384 = vmatpush.msra.mxu0 %v83
    %385 = vmatpush.msra.mxu0 %v82
    %386 = vmatpush.msra.mxu0 %v81
    %387 = vmatmul.f32.gmra.mxu0 %v369
    %v388 = vpop.f32.mrf.mxu0
    %v389 = vadd.f32 0.0, %v388
    %390 = vdwg.mxu0
    %v391 = vadd.f32 %v79, %v389
    %v392 = vxor.u32 %v391, 2147483648
    %v393 = vmul.f32 %v392, 1.442695
    %v394 = vpow.pop %v393
    %v395 = vadd.f32 %v394, 1.0
    %v396 = vrcp.pop %v395
    %v397 = vmul.f32 %v395, %v396
    %v398 = vsub.f32 1.0, %v397
    %v399 = vmul.f32 %v396, %v398
    %v400 = vadd.f32 %v396, %v399
    %vm401 = vweird.f32 %v395
    %vm402 = vweird.f32 %v396
    %vm403 = vmor %vm401, %vm402
    %v404 = vsel %vm403, %v396, %v400
    %v405 = vand.u32 2147483647, %v395
    %vm406 = vcmp.eq.f32.partialorder %v405, 8.507059e+37
    %v407 = vand.u32 %v395, 2147483648
    %v408 = vor.u32 1.1754944e-38, %v407
    %v409 = vsel %vm406, %v408, %v404
    %v410 = vmul.f32 1.0, %v409
    %v411 = vmul.f32 %v410, 2.0
    %v412 = vsub.f32 %v411, 1.0
    %v414 = vrot.slane %v358, 6
    %v416 = vmul.f32 %v410, %v414
    %418 = vrot.lane.b32.xlu0 %v412, 64
    %v419 = vpop.permute.xlu0 %418
    %v421 = vmul.f32 %v410, %v419
    %423 = vrot.lane.b32.xlu0 %v421, 32
    %v424 = vpop.permute.xlu0 %423
    %v426 = vadd.f32 %v416, %v424
    %v427 = vtanh.pop %v426
    %429 = vrot.lane.b32.xlu0 %v427, 64
    %v430 = vpop.permute.xlu0 %429
    %v432 = vmul.f32 %v410, %v430
    %434 = vrot.lane.b32.xlu0 %v432, 32
    %v435 = vpop.permute.xlu0 %434
    %v436 = vsel %vm51, %v435, 0
    %438 = vmatpush.msra.mxu0 0.0
    %439 = vmatpush.msra.mxu0 0.0
    %440 = vmatpush.msra.mxu0 0.0
    %441 = vmatpush.msra.mxu0 0.0
    %442 = vmatpush.msra.mxu0 0.0
    %443 = vmatpush.msra.mxu0 0.0
    %444 = vmatpush.msra.mxu0 0.0
    %445 = vmatpush.msra.mxu0 0.0
    %446 = vmatpush.msra.mxu0 0.0
    %447 = vmatpush.msra.mxu0 0.0
    %448 = vmatpush.msra.mxu0 0.0
    %449 = vmatpush.msra.mxu0 0.0
    %450 = vmatpush.msra.mxu0 %v84
    %451 = vmatpush.msra.mxu0 %v83
    %452 = vmatpush.msra.mxu0 %v82
    %453 = vmatpush.msra.mxu0 %v81
    %454 = vmatmul.f32.gmra.mxu0 %v436
    %v455 = vpop.f32.mrf.mxu0
    %v456 = vadd.f32 0.0, %v455
    %457 = vdwg.mxu0
    %v459 = vrot.slane %v456, 6
    %v461 = vadd.f32 %v79, %v459
    %v462 = vxor.u32 %v461, 2147483648
    %v463 = vmul.f32 %v462, 1.442695
    %v464 = vpow.pop %v463
    %v465 = vadd.f32 %v464, 1.0
    %v466 = vrcp.pop %v465
    %v467 = vmul.f32 %v465, %v466
    %v468 = vsub.f32 1.0, %v467
    %v469 = vmul.f32 %v466, %v468
    %v470 = vadd.f32 %v466, %v469
    %vm471 = vweird.f32 %v465
    %vm472 = vweird.f32 %v466
    %vm473 = vmor %vm471, %vm472
    %v474 = vsel %vm473, %v466, %v470
    %v475 = vand.u32 2147483647, %v465
    %vm476 = vcmp.eq.f32.partialorder %v475, 8.507059e+37
    %v477 = vand.u32 %v465, 2147483648
    %v478 = vor.u32 1.1754944e-38, %v477
    %v479 = vsel %vm476, %v478, %v474
    %v480 = vmul.f32 1.0, %v479
    %v481 = vmul.f32 %v480, 2.0
    %v482 = vsub.f32 %v481, 1.0
    %v484 = vrot.slane %v426, 6
    %v486 = vmul.f32 %v480, %v484
    %488 = vrot.lane.b32.xlu0 %v482, 64
    %v489 = vpop.permute.xlu0 %488
    %v491 = vmul.f32 %v480, %v489
    %493 = vrot.lane.b32.xlu0 %v491, 32
    %v494 = vpop.permute.xlu0 %493
    %v496 = vadd.f32 %v486, %v494
    %v497 = vtanh.pop %v496
    %499 = vrot.lane.b32.xlu0 %v497, 64
    %v500 = vpop.permute.xlu0 %499
    %v502 = vmul.f32 %v480, %v500
    %v504 = vrot.slane %v502, 2
    %505 = vrot.lane.b32.xlu0 %v504, 32
    %v506 = vpop.permute.xlu0 %505
    %v507 = vsel %vm51, %v506, 0
    %509 = vmatpush.msra.mxu0 0.0
    %510 = vmatpush.msra.mxu0 0.0
    %511 = vmatpush.msra.mxu0 0.0
    %512 = vmatpush.msra.mxu0 0.0
    %513 = vmatpush.msra.mxu0 0.0
    %514 = vmatpush.msra.mxu0 0.0
    %515 = vmatpush.msra.mxu0 0.0
    %516 = vmatpush.msra.mxu0 0.0
    %517 = vmatpush.msra.mxu0 0.0
    %518 = vmatpush.msra.mxu0 0.0
    %519 = vmatpush.msra.mxu0 0.0
    %520 = vmatpush.msra.mxu0 0.0
    %521 = vmatpush.msra.mxu0 %v84
    %522 = vmatpush.msra.mxu0 %v83
    %523 = vmatpush.msra.mxu0 %v82
    %524 = vmatpush.msra.mxu0 %v81
    %525 = vmatmul.f32.gmra.mxu0 %v507
    %v526 = vpop.f32.mrf.mxu0
    %v527 = vadd.f32 0.0, %v526
    %528 = vdwg.mxu0
    %v530 = vrot.slane %v527, 4
    %v532 = vadd.f32 %v79, %v530
    %v533 = vxor.u32 %v532, 2147483648
    %v534 = vmul.f32 %v533, 1.442695
    %v535 = vpow.pop %v534
    %v536 = vadd.f32 %v535, 1.0
    %v537 = vrcp.pop %v536
    %v538 = vmul.f32 %v536, %v537
    %v539 = vsub.f32 1.0, %v538
    %v540 = vmul.f32 %v537, %v539
    %v541 = vadd.f32 %v537, %v540
    %vm542 = vweird.f32 %v536
    %vm543 = vweird.f32 %v537
    %vm544 = vmor %vm542, %vm543
    %v545 = vsel %vm544, %v537, %v541
    %v546 = vand.u32 2147483647, %v536
    %vm547 = vcmp.eq.f32.partialorder %v546, 8.507059e+37
    %v548 = vand.u32 %v536, 2147483648
    %v549 = vor.u32 1.1754944e-38, %v548
    %v550 = vsel %vm547, %v549, %v545
    %v551 = vmul.f32 1.0, %v550
    %v552 = vmul.f32 %v551, 2.0
    %v553 = vsub.f32 %v552, 1.0
    %v555 = vrot.slane %v496, 6
    %v557 = vmul.f32 %v551, %v555
    %559 = vrot.lane.b32.xlu0 %v553, 64
    %v560 = vpop.permute.xlu0 %559
    %v562 = vmul.f32 %v551, %v560
    %564 = vrot.lane.b32.xlu0 %v562, 32
    %v565 = vpop.permute.xlu0 %564
    %v567 = vadd.f32 %v557, %v565
    %v568 = vtanh.pop %v567
    %570 = vrot.lane.b32.xlu0 %v568, 64
    %v571 = vpop.permute.xlu0 %570
    %v573 = vmul.f32 %v551, %v571
    %v575 = vrot.slane %v573, 4
    %576 = vrot.lane.b32.xlu0 %v575, 32
    %v577 = vpop.permute.xlu0 %576
    %v578 = vsel %vm51, %v577, 0
    %580 = vmatpush.msra.mxu0 0.0
    %581 = vmatpush.msra.mxu0 0.0
    %582 = vmatpush.msra.mxu0 0.0
    %583 = vmatpush.msra.mxu0 0.0
    %584 = vmatpush.msra.mxu0 0.0
    %585 = vmatpush.msra.mxu0 0.0
    %586 = vmatpush.msra.mxu0 0.0
    %587 = vmatpush.msra.mxu0 0.0
    %588 = vmatpush.msra.mxu0 0.0
    %589 = vmatpush.msra.mxu0 0.0
    %590 = vmatpush.msra.mxu0 0.0
    %591 = vmatpush.msra.mxu0 0.0
    %592 = vmatpush.msra.mxu0 %v84
    %593 = vmatpush.msra.mxu0 %v83
    %594 = vmatpush.msra.mxu0 %v82
    %595 = vmatpush.msra.mxu0 %v81
    %596 = vmatmul.f32.gmra.mxu0 %v578
    %v597 = vpop.f32.mrf.mxu0
    %v598 = vadd.f32 0.0, %v597
    %599 = vdwg.mxu0
    %v601 = vrot.slane %v598, 2
    %v603 = vadd.f32 %v79, %v601
    %v604 = vxor.u32 %v603, 2147483648
    %v605 = vmul.f32 %v604, 1.442695
    %v606 = vpow.pop %v605
    %v607 = vadd.f32 %v606, 1.0
    %v608 = vrcp.pop %v607
    %v609 = vmul.f32 %v607, %v608
    %v610 = vsub.f32 1.0, %v609
    %v611 = vmul.f32 %v608, %v610
    %v612 = vadd.f32 %v608, %v611
    %vm613 = vweird.f32 %v607
    %vm614 = vweird.f32 %v608
    %vm615 = vmor %vm613, %vm614
    %v616 = vsel %vm615, %v608, %v612
    %v617 = vand.u32 2147483647, %v607
    %vm618 = vcmp.eq.f32.partialorder %v617, 8.507059e+37
    %v619 = vand.u32 %v607, 2147483648
    %v620 = vor.u32 1.1754944e-38, %v619
    %v621 = vsel %vm618, %v620, %v616
    %v622 = vmul.f32 1.0, %v621
    %v623 = vmul.f32 %v622, 2.0
    %v624 = vsub.f32 %v623, 1.0
    %v626 = vrot.slane %v567, 6
    %v628 = vmul.f32 %v622, %v626
    %630 = vrot.lane.b32.xlu0 %v624, 64
    %v631 = vpop.permute.xlu0 %630
    %v633 = vmul.f32 %v622, %v631
    %635 = vrot.lane.b32.xlu0 %v633, 32
    %v636 = vpop.permute.xlu0 %635
    %v638 = vadd.f32 %v628, %v636
    %v639 = vtanh.pop %v638
    %641 = vrot.lane.b32.xlu0 %v639, 64
    %v642 = vpop.permute.xlu0 %641
    %v644 = vmul.f32 %v622, %v642
    %646 = vrot.lane.b32.xlu0 %v644, 32
    %v647 = vpop.permute.xlu0 %646
    %vm649 = vcmask 261126
    %650 = vst.msk [vmem:[%s12 - $0x6] sm:$0xc0] %vm649, %v647
    %652 = vrot.lane.b32.xlu0 %v638, 96
    %v653 = vpop.permute.xlu0 %652
    %655 = vst.msk [vmem:[%s12 - $0x4] sm:$0xc0] %vm649, %v653
    %vm656 = vcmask 1041408
    %v657 = vsel %vm656, %v152, %v222
    %vm658 = vcmask 1043456
    %v659 = vsel %vm658, %v657, %v293
    %vm660 = vcmask 1045504
    %v661 = vsel %vm660, %v659, %v364
    %v662 = vsel %vm656, %v432, %v502
    %v663 = vsel %vm658, %v662, %v573
    %v664 = vsel %vm660, %v663, %v644
    %v665 = vld [vmem:[%s3] sm:$0xff]
    %v666 = vld [vmem:[%s3 + $0x8] sm:$0xff]
    %669 = vrot.lane.b32.xlu0 %v661, 32
    %v670 = vpop.permute.xlu0 %669
    %671 = vrot.lane.b32.xlu0 %v664, 32
    %v672 = vpop.permute.xlu0 %671
    %v673 = vsel %vm51, %v670, 0
    %v675 = vsel %vm51, %v672, 0
    %v678 = vsel %vm51, %v665, 0
    %v681 = vsel %vm51, %v666, 0
    %683 = vmatpush.xpose.msra.mxu0 0.0
    %684 = vmatpush.xpose.msra.mxu0 0.0
    %685 = vmatpush.xpose.msra.mxu0 0.0
    %686 = vmatpush.xpose.msra.mxu0 0.0
    %687 = vmatpush.xpose.msra.mxu0 0.0
    %688 = vmatpush.xpose.msra.mxu0 0.0
    %689 = vmatpush.xpose.msra.mxu0 0.0
    %690 = vmatpush.xpose.msra.mxu0 0.0
    %691 = vmatpush.xpose.msra.mxu0 0.0
    %692 = vmatpush.xpose.msra.mxu0 0.0
    %693 = vmatpush.xpose.msra.mxu0 0.0
    %694 = vmatpush.xpose.msra.mxu0 0.0
    %695 = vmatpush.xpose.msra.mxu0 0.0
    %696 = vmatpush.xpose.msra.mxu0 0.0
    %697 = vmatpush.xpose.msra.mxu0 %v681
    %698 = vmatpush.xpose.msra.mxu0 %v678
    %699 = vmatmul.f32.gmra.mxu0 %v673
    %v700 = vpop.f32.mrf.mxu0
    %v701 = vadd.f32 0.0, %v700
    %702 = vmatmul.f32.gmra.mxu0 %v675
    %v703 = vpop.f32.mrf.mxu0
    %v704 = vadd.f32 0.0, %v703
    %705 = vdwg.mxu0
    %v706 = vlaneseq
    %v707 = vshrl.u32 %v706, 7
    %v708 = vadd.s32 %v707, 8
    %vm709 = vcmp.lt.s32.totalorder %v707, 0
    %v710 = vsub.s32 0, %v707
    %v711 = vsel %vm709, %v710, %v707
    %v712 = vshrl.u32 %v711, 1
    %v713 = vand.u32 %v711, 1
    %v714 = vsub.s32 0, %v713
    %v715 = vsel %vm709, %v714, %v713
    %vm716 = vcmp.lt.s32.totalorder %v708, 0
    %v717 = vsub.s32 0, %v708
    %v718 = vsel %vm716, %v717, %v708
    %v719 = vshrl.u32 %v718, 1
    %v720 = vand.u32 %v718, 1
    %v721 = vsub.s32 0, %v720
    %v722 = vsel %vm716, %v721, %v720
    %vm723 = vcmp.ne.s32.totalorder %v715, 0
    %vm724 = vcmp.ne.s32.totalorder %v722, 0
    %vm725 = vcmp.lt.s32.totalorder %v715, 0
    %vm726 = vcmp.lt.s32.totalorder %v722, 0
    %vm727 = vmand %vm725, %vm723
    %vm728 = vmand %vm726, %vm724
    %v729 = vadd.s32 %v715, 2
    %v730 = vadd.s32 %v722, 2
    %v731 = vsel %vm727, %v729, %v715
    %v732 = vsel %vm728, %v730, %v722
    %v733 = vlaneseq
    %v734 = vand.u32 %v733, 127
    %vm735 = vcmp.lt.s32.totalorder %v734, 0
    %v736 = vsub.s32 0, %v734
    %v737 = vsel %vm735, %v736, %v734
    %v738 = vshrl.u32 %v737, 1
    %v739 = vand.u32 %v737, 1
    %v740 = vsub.s32 0, %v739
    %v741 = vsel %vm735, %v740, %v739
    %vm742 = vcmp.ne.s32.totalorder %v741, 0
    %vm743 = vcmp.lt.s32.totalorder %v741, 0
    %vm744 = vmand %vm743, %vm742
    %v745 = vadd.s32 %v741, 2
    %v746 = vsel %vm744, %v745, %v741
    %vm747 = vcmp.eq.s32.totalorder %v731, %v746
    %vm748 = vcmp.eq.s32.totalorder %v732, %v746
    %v749 = vsel %vm747, %v701, -1e+30
    %v750 = vsel %vm748, %v704, -1e+30
    %vm751 = vcmask 130048
    %v752 = vsel %vm751, %v749, -inf
    %753 = vmax.xlane.f32.xlu0 %v752
    %v754 = vpop.xlane.xlu0 %753
    %v755 = vsel %vm751, %v750, -inf
    %756 = vmax.xlane.f32.xlu0 %v755
    %v757 = vpop.xlane.xlu0 %756
    %v758 = vsub.f32 %v749, %v754
    %v759 = vsub.f32 %v750, %v757
    %v760 = vmul.f32 %v758, 1.442695
    %v761 = vpow.pop %v760
    %v762 = vmul.f32 %v759, 1.442695
    %v763 = vpow.pop %v762
    %v764 = vsel %vm751, %v761, 0.0
    %765 = vadd.xlane.f32.xlu0 %v764
    %v766 = vpop.xlane.xlu0 %765
    %v767 = vsel %vm751, %v763, 0.0
    %768 = vadd.xlane.f32.xlu0 %v767
    %v769 = vpop.xlane.xlu0 %768
    %v770 = vrcp.pop %v766
    %v771 = vmul.f32 %v766, %v770
    %v772 = vsub.f32 1.0, %v771
    %v773 = vmul.f32 %v770, %v772
    %v774 = vadd.f32 %v770, %v773
    %vm775 = vweird.f32 %v766
    %vm776 = vweird.f32 %v770
    %vm777 = vmor %vm775, %vm776
    %v778 = vsel %vm777, %v770, %v774
    %v779 = vand.u32 2147483647, %v766
    %vm780 = vcmp.eq.f32.partialorder %v779, 8.507059e+37
    %v781 = vand.u32 %v766, 2147483648
    %v782 = vor.u32 1.1754944e-38, %v781
    %v783 = vsel %vm780, %v782, %v778
    %v784 = vmul.f32 %v761, %v783
    %v785 = vrcp.pop %v769
    %v786 = vmul.f32 %v769, %v785
    %v787 = vsub.f32 1.0, %v786
    %v788 = vmul.f32 %v785, %v787
    %v789 = vadd.f32 %v785, %v788
    %vm790 = vweird.f32 %v769
    %vm791 = vweird.f32 %v785
    %vm792 = vmor %vm790, %vm791
    %v793 = vsel %vm792, %v785, %v789
    %v794 = vand.u32 2147483647, %v769
    %vm795 = vcmp.eq.f32.partialorder %v794, 8.507059e+37
    %v796 = vand.u32 %v769, 2147483648
    %v797 = vor.u32 1.1754944e-38, %v796
    %v798 = vsel %vm795, %v797, %v793
    %v799 = vmul.f32 %v763, %v798
    %v801 = vsel %vm751, %v784, 0
    %v804 = vsel %vm751, %v799, 0
    %806 = vmatpush.msra.mxu0 0.0
    %807 = vmatpush.msra.mxu0 0.0
    %808 = vmatpush.msra.mxu0 0.0
    %809 = vmatpush.msra.mxu0 0.0
    %810 = vmatpush.msra.mxu0 0.0
    %811 = vmatpush.msra.mxu0 0.0
    %812 = vmatpush.msra.mxu0 0.0
    %813 = vmatpush.msra.mxu0 0.0
    %814 = vmatpush.msra.mxu0 0.0
    %815 = vmatpush.msra.mxu0 0.0
    %816 = vmatpush.msra.mxu0 0.0
    %817 = vmatpush.msra.mxu0 0.0
    %818 = vmatpush.msra.mxu0 0.0
    %819 = vmatpush.msra.mxu0 0.0
    %820 = vmatpush.msra.mxu0 %v666
    %821 = vmatpush.msra.mxu0 %v665
    %822 = vmatmul.f32.gmra.mxu0 %v801
    %v823 = vpop.f32.mrf.mxu0
    %v824 = vadd.f32 0.0, %v823
    %825 = vmatmul.f32.gmra.mxu0 %v804
    %v826 = vpop.f32.mrf.mxu0
    %v827 = vadd.f32 0.0, %v826
    %828 = vdwg.mxu0
    %v829 = vld [vmem:[%s7] sm:$0xff]
    %v830 = vld [vmem:[%s7 + $0x8] sm:$0xff]
    %v831 = vld [vmem:[%s7 + $0x10] sm:$0xff]
    %v832 = vld [vmem:[%s7 + $0x18] sm:$0xff]
    %v833 = vld [vmem:[%s8] sm:$0xff]
    %v834 = vld [vmem:[%s8 + $0x8] sm:$0xff]
    %v835 = vld [vmem:[%s8 + $0x10] sm:$0xff]
    %v836 = vld [vmem:[%s8 + $0x18] sm:$0xff]
    %v838 = vsel %vm51, %v824, 0
    %v841 = vsel %vm51, %v827, 0
    %843 = vmatpush.msra.mxu0 0.0
    %844 = vmatpush.msra.mxu0 0.0
    %845 = vmatpush.msra.mxu0 0.0
    %846 = vmatpush.msra.mxu0 0.0
    %847 = vmatpush.msra.mxu0 0.0
    %848 = vmatpush.msra.mxu0 0.0
    %849 = vmatpush.msra.mxu0 0.0
    %850 = vmatpush.msra.mxu0 0.0
    %851 = vmatpush.msra.mxu0 0.0
    %852 = vmatpush.msra.mxu0 0.0
    %853 = vmatpush.msra.mxu0 0.0
    %854 = vmatpush.msra.mxu0 0.0
    %855 = vmatpush.msra.mxu0 %v836
    %856 = vmatpush.msra.mxu0 %v835
    %857 = vmatpush.msra.mxu0 %v834
    %858 = vmatpush.msra.mxu0 %v833
    %859 = vmatmul.f32.gmra.mxu0 %v838
    %v860 = vpop.f32.mrf.mxu0
    %v861 = vadd.f32 0.0, %v860
    %862 = vmatmul.f32.gmra.mxu0 %v841
    %v863 = vpop.f32.mrf.mxu0
    %v864 = vadd.f32 0.0, %v863
    %865 = vdwg.mxu0
    %866 = vmatpush.msra.mxu0 0.0
    %867 = vmatpush.msra.mxu0 0.0
    %868 = vmatpush.msra.mxu0 0.0
    %869 = vmatpush.msra.mxu0 0.0
    %870 = vmatpush.msra.mxu0 0.0
    %871 = vmatpush.msra.mxu0 0.0
    %872 = vmatpush.msra.mxu0 0.0
    %873 = vmatpush.msra.mxu0 0.0
    %874 = vmatpush.msra.mxu0 0.0
    %875 = vmatpush.msra.mxu0 0.0
    %876 = vmatpush.msra.mxu0 0.0
    %877 = vmatpush.msra.mxu0 0.0
    %878 = vmatpush.msra.mxu0 %v832
    %879 = vmatpush.msra.mxu0 %v831
    %880 = vmatpush.msra.mxu0 %v830
    %881 = vmatpush.msra.mxu0 %v829
    %882 = vmatmul.f32.gmra.mxu0 %v673
    %v883 = vpop.f32.mrf.mxu0
    %v884 = vadd.f32 %v861, %v883
    %885 = vmatmul.f32.gmra.mxu0 %v675
    %v886 = vpop.f32.mrf.mxu0
    %v887 = vadd.f32 %v864, %v886
    %888 = vdwg.mxu0
    %v889 = vtanh.pop %v884
    %v890 = vtanh.pop %v887
    %v891 = vld [vmem:[%s9] sm:$0xff]
    %v892 = vld [vmem:[%s9 + $0x8] sm:$0xff]
    %v893 = vld [vmem:[%s9 + $0x10] sm:$0xff]
    %v894 = vld [vmem:[%s9 + $0x18] sm:$0xff]
    %v895 = vld [vmem:[%s10] sm:$0x1]
    %v897 = vperm.slane %v895, 0
    %v900 = vsel %vm51, %v889, 0
    %v903 = vsel %vm51, %v890, 0
    %905 = vmatpush.msra.mxu0 0.0
    %906 = vmatpush.msra.mxu0 0.0
    %907 = vmatpush.msra.mxu0 0.0
    %908 = vmatpush.msra.mxu0 0.0
    %909 = vmatpush.msra.mxu0 0.0
    %910 = vmatpush.msra.mxu0 0.0
    %911 = vmatpush.msra.mxu0 0.0
    %912 = vmatpush.msra.mxu0 0.0
    %913 = vmatpush.msra.mxu0 0.0
    %914 = vmatpush.msra.mxu0 0.0
    %915 = vmatpush.msra.mxu0 0.0
    %916 = vmatpush.msra.mxu0 0.0
    %917 = vmatpush.msra.mxu0 %v894
    %918 = vmatpush.msra.mxu0 %v893
    %919 = vmatpush.msra.mxu0 %v892
    %920 = vmatpush.msra.mxu0 %v891
    %921 = vmatmul.f32.gmra.mxu0 %v900
    %v922 = vpop.f32.mrf.mxu0
    %v923 = vadd.f32 %v897, %v922
    %924 = vmatmul.f32.gmra.mxu0 %v903
    %v925 = vpop.f32.mrf.mxu0
    %v926 = vadd.f32 %v897, %v925
    %927 = vdwg.mxu0
    %vm928 = vcmask 64512
    %929 = vst.msk [vmem:[#allocation2] sm:$0xff] %vm928, %v923
    %930 = vst.msk [vmem:[#allocation2 + $0x8] sm:$0xff] %vm928, %v926
    // Predicated region
    $region46: #{seq_regressor_forward.1} parent=1 // pred_check
      _
    $region47: #{seq_regressor_forward.1} parent=1 // pred_check_branch
      %932 = sbr.rel (0) target = $region49
    $region48: #{seq_regressor_forward.1} parent=1 // pred_region
      %934 = vsyncadd [#allocation3], 0
      %s935 = sshll.u32 [#allocation2], 4
      %s936 = int_to_ptr.vmem [resolvable:$true] %s935
      %s937 = sshll.u32 %s11, 4
      %s938 = int_to_ptr.hbm [resolvable:$true] %s937
      %943 = dma.vmem_to_hbm [thread:$0]  %s936, 256, %s938, [#allocation3], 128, 128, 8
    $region49: #{seq_regressor_forward.1} parent=1 // pred_fallthru
      _
    // Predicated region
    $region50: #{seq_regressor_forward.1} parent=1 // pred_check
      _
    $region51: #{seq_regressor_forward.1} parent=1 // pred_check_branch
      %945 = sbr.rel (0) target = $region53
    $region52: #{seq_regressor_forward.1} parent=1 // pred_region
      _
    $region53: #{seq_regressor_forward.1} parent=1 // pred_fallthru
      _
    // Predicated region
    $region54: #{seq_regressor_forward.1} parent=1 // pred_check
      _
    $region55: #{seq_regressor_forward.1} parent=1 // pred_check_branch
      %947 = sbr.rel (0) target = $region57
    $region56: #{seq_regressor_forward.1} parent=1 // pred_region
      %949 = dma.done [#allocation3], 256
    $region57: #{seq_regressor_forward.1} parent=1 // pred_fallthru
      _
    // Predicated region
    $region58: #{seq_regressor_forward.1} parent=1 // pred_check
      _
    $region59: #{seq_regressor_forward.1} parent=1 // pred_check_branch
      %951 = sbr.rel (0) target = $region61
    $region60: #{seq_regressor_forward.1} parent=1 // pred_region
      _
    $region61: #{seq_regressor_forward.1} parent=1 // pred_fallthru
      _
    %952 = vsyncpa [#allocation3], 1

</llo_original>
